<compile_context>
chip_gen: v6e
topology: v6e:2x2x1
jax: 0.10.0
libtpu: 0.0.40
codegen_flags: <defaults>
</compile_context>

<pallas_src>
import functools

import jax
import jax.numpy as jnp
from jax.experimental import pallas as pl
from jax.experimental.pallas import tpu as pltpu


LANES = 128
SUBLANES = 8
ALIGN = SUBLANES * LANES            # 1024-element alignment for the kernel prefix
MAX_TM = 8192                       # rows per input block -> 4 MiB f32 per block
VMEM_LIMIT_BYTES = 32 * 1024 * 1024  # explicit: 16 MiB of double-buffered inputs + slack


def _round_up(x, m):
    return ((x + m - 1) // m) * m


def _num_tensorcores():
    """2 on v7x (2 TCs/chip), 1 on single-TC v5e/v6e. Defensive default: 1."""
    try:
        kind = jax.devices()[0].device_kind.lower()
    except Exception:
        return 1
    return 2 if ("v7" in kind or "tpu7" in kind) else 1


def _sq_diff_partial_kernel(c_ref, g_ref, out_ref, *, tm, steps, rows, needs_mask):
    """Accumulate sum((c - g)^2) of this core's row range into an (8, 128) partial."""
    c = pl.program_id(0)   # core / "parallel" axis
    i = pl.program_id(1)   # reduction axis ("arbitrary")

    @pl.when(i == 0)
    def _():
        out_ref[...] = jnp.zeros_like(out_ref)

    # In-kernel f32 upcast: required on v5e (no bf16 VPU), free filler elsewhere;
    # also lets bf16 slabs stay bf16 in HBM (half the bandwidth per element).
    d = c_ref[...].astype(jnp.float32) - g_ref[...].astype(jnp.float32)
    sq = d * d

    def fold(x):
        # (tm, 128) -> (8, 128): aligned with native sublane tiling, pure VALU adds.
        return jnp.sum(x.reshape(tm // SUBLANES, SUBLANES, LANES), axis=0)

    if needs_mask:
        blk = c * steps + i
        is_full = (blk + 1) * tm <= rows   # block entirely within the true row range

        @pl.when(is_full)
        def _():
            out_ref[...] += fold(sq)       # steady state: no mask work

        @pl.when(jnp.logical_not(is_full))
        def _():
            # Ragged last block (boundary garbage rows) and/or clamped duplicate
            # blocks on an uneven core split: zero out-of-range rows.
            gidx = blk * tm + jax.lax.broadcasted_iota(jnp.int32, (tm, LANES), 0)
            out_ref[...] += fold(jnp.where(gidx < rows, sq, 0.0))
    else:
        out_ref[...] += fold(sq)


def _sq_diff_sum_slabs(c2d, g2d, *, max_tm=MAX_TM):
    """Pallas sum((c - g)^2) over lane-dense (rows, 128) slabs (rows % 8 == 0)."""
    rows = c2d.shape[0]
    ncores = _num_tensorcores()

    # Tile height: split rows across the TensorCores (1 on v5e/v6e, 2 on v7x),
    # capped at max_tm so double-buffered inputs stay under the VMEM limit.
    tm = max(SUBLANES, min(max_tm, _round_up(pl.cdiv(rows, ncores), SUBLANES)))
    nblk = pl.cdiv(rows, tm)
    ncores = ncores if nblk >= ncores else 1
    steps = pl.cdiv(nblk, ncores)

    needs_clamp = ncores * steps != nblk              # some logical blocks start OOB
    needs_mask = (rows % tm != 0) or needs_clamp      # ragged edge and/or OOB blocks

    def in_map(c, i):
        blk = c * steps + i
        if needs_clamp:
            blk = jnp.minimum(blk, nblk - 1)          # contribution masked to 0 in-kernel
        return (blk, 0)

    kernel = functools.partial(
        _sq_diff_partial_kernel, tm=tm, steps=steps, rows=rows, needs_mask=needs_mask)

    elems = rows * LANES
    bytes_accessed = int(c2d.size) * c2d.dtype.itemsize \
        + int(g2d.size) * g2d.dtype.itemsize \
        + ncores * SUBLANES * LANES * 4

    partials = pl.pallas_call(
        kernel,
        out_shape=jax.ShapeDtypeStruct((ncores * SUBLANES, LANES), jnp.float32),
        grid_spec=pltpu.PrefetchScalarGridSpec(
            num_scalar_prefetch=0,
            grid=(ncores, steps),
            in_specs=[
                pl.BlockSpec((tm, LANES), in_map),
                pl.BlockSpec((tm, LANES), in_map),
            ],
            out_specs=pl.BlockSpec((SUBLANES, LANES), lambda c, i: (c, 0)),
        ),
        compiler_params=pltpu.CompilerParams(
            dimension_semantics=("parallel", "arbitrary"),
            vmem_limit_bytes=VMEM_LIMIT_BYTES,
        ),
        cost_estimate=pl.CostEstimate(
            flops=4 * elems, transcendentals=0, bytes_accessed=bytes_accessed),
    )(c2d, g2d)

    # Tiny final cross-lane reduce, once, outside the hot loop.
    return jnp.sum(partials)


def _split_aligned(x):
    """Flatten; split into a (rows, 128) prefix (rows % 8 == 0, free reshape when the
    size is 1024-aligned) and a < 1024-element tail. No full-array padding copy."""
    flat = x.reshape(-1)
    n = flat.shape[0]
    n_prefix = (n // ALIGN) * ALIGN
    if n_prefix == n:
        return flat.reshape(n // LANES, LANES), None, n
    prefix = flat[:n_prefix].reshape(n_prefix // LANES, LANES) if n_prefix else None
    tail = flat[n_prefix:]
    return prefix, tail, n


def _mse_from_parts(c_prefix, c_tail, g_prefix, g_tail, n, *, max_tm=MAX_TM):
    total = jnp.float32(0.0)
    if c_prefix is not None:
        total = total + _sq_diff_sum_slabs(c_prefix, g_prefix, max_tm=max_tm)
    if c_tail is not None:
        dt = c_tail.astype(jnp.float32) - g_tail.astype(jnp.float32)
        total = total + jnp.sum(dt * dt)
    return total / jnp.float32(n)


def mse_loss_pallas(content, generated, *, max_tm=MAX_TM):
    """Scalar MSE(content, generated), mean over all elements (matches F.mse_loss)."""
    assert content.shape == generated.shape, "shape mismatch"
    c_prefix, c_tail, n = _split_aligned(content)
    g_prefix, g_tail, _ = _split_aligned(generated)
    return _mse_from_parts(c_prefix, c_tail, g_prefix, g_tail, n, max_tm=max_tm)


class ContentLoss:
    """JAX/Pallas port of the PyTorch ContentLoss module."""

    def __init__(self, content):
        # `.detach()` in PyTorch -> stop_gradient here. The content slab/tail split
        # is precomputed once since the content target is constant across calls.
        content = jax.lax.stop_gradient(content)
        self._shape = content.shape
        self._c_prefix, self._c_tail, self._n = _split_aligned(content)
        self.loss = None

    def __call__(self, generated, calc_loss=True):
        # TODO(synk): the original forward reads a module-level global `calc_loss`;
        # it is exposed here as a keyword argument instead.
        if calc_loss:
            assert generated.shape == self._shape, "shape mismatch"
            g_prefix, g_tail, _ = _split_aligned(generated)
            self.loss = _mse_from_parts(self._c_prefix, self._c_tail,
                                        g_prefix, g_tail, self._n)
        return generated  # identity pass-through, exactly like the module


if __name__ == "__main__":
    key = jax.random.PRNGKey(0)

    # (shape, max_tm override) — the small max_tm forces the multi-block + gated
    # mask path at small test sizes; production uses MAX_TM.
    cases = [
        ((2, 4, 16, 16), MAX_TM),    # primary NCHW feature map: single aligned block
        ((1, 3, 120, 128), MAX_TM),  # 45 aligned 1024-elem groups, single block
        ((1, 3, 120, 128), 16),      # forced small tiles: ragged last block, masked path
        ((1, 3, 33, 33), MAX_TM),    # kernel prefix + 195-element jnp tail
        ((1, 3, 17, 19), MAX_TM),    # < 1024 elements: pure tail path (no kernel call)
    ]

    for idx, (shape, max_tm) in enumerate(cases):
        k1, k2 = jax.random.split(jax.random.fold_in(key, idx))
        content = jax.random.normal(k1, shape, dtype=jnp.float32)
        generated = jax.random.normal(k2, shape, dtype=jnp.float32)

        loss = jax.block_until_ready(mse_loss_pallas(content, generated, max_tm=max_tm))
        ref_loss = jnp.mean((content - generated) ** 2)
        assert jnp.allclose(loss, ref_loss, rtol=1e-4, atol=1e-6), (shape, loss, ref_loss)

    # Module-style usage (identity pass-through + cached loss), like the PyTorch class.
    shape = (2, 4, 16, 16)
    k1, k2 = jax.random.split(jax.random.fold_in(key, 100))
    content = jax.random.normal(k1, shape, dtype=jnp.float32)
    generated = jax.random.normal(k2, shape, dtype=jnp.float32)

    module = ContentLoss(content)
    out = jax.block_until_ready(module(generated))
    loss = jax.block_until_ready(module.loss)
    ref_loss = jnp.mean((content - generated) ** 2)

    assert out.shape == generated.shape
    assert jnp.allclose(out, generated)
    assert jnp.allclose(loss, ref_loss, rtol=1e-4, atol=1e-6)

    print("KERNEL_OK")
</pallas_src>

<mosaic_0001>
module attributes {stable_mosaic.version = 11 : i64} {
  func.func @_sq_diff_partial_kernel(%arg0: i32, %arg1: i32, %arg2: memref<16x128xf32, #tpu.memory_space<vmem>>, %arg3: memref<16x128xf32, #tpu.memory_space<vmem>>, %arg4: memref<8x128xf32, #tpu.memory_space<vmem>>) attributes {dimension_semantics = [#tpu.dimension_semantics<parallel>, #tpu.dimension_semantics<arbitrary>], iteration_bounds = array<i64: 1, 1>, scalar_prefetch = 0 : i64, scratch_operands = 0 : i64, tpu.core_type = #tpu.core_type<tc>, window_params = [{transform_indices = @transform_0, window_bounds = array<i64: 16, 128>}, {transform_indices = @transform_1, window_bounds = array<i64: 16, 128>}, {transform_indices = @transform_2, window_bounds = array<i64: 8, 128>}]} {
    %c0_i32 = arith.constant 0 : i32
    %0 = arith.cmpi eq, %arg1, %c0_i32 : i32
    %1 = arith.extui %0 : i1 to i32
    %c0_i32_0 = arith.constant 0 : i32
    %2 = arith.cmpi ne, %1, %c0_i32_0 : i32
    scf.if %2 {
      %cst_8 = arith.constant 0.000000e+00 : f32
      %12 = vector.broadcast %cst_8 : f32 to vector<8x128xf32>
      %c0_9 = arith.constant 0 : index
      %c0_10 = arith.constant 0 : index
      %13 = vector.load %arg4[%c0_9, %c0_10] : memref<8x128xf32, #tpu.memory_space<vmem>>, vector<8x128xf32>
      tpu.vector_store %arg4[%c0_9, %c0_10], %12 {strides = array<i32>} : memref<8x128xf32, #tpu.memory_space<vmem>>, vector<8x128xf32>,
    } else {
    }
    %c0 = arith.constant 0 : index
    %c0_1 = arith.constant 0 : index
    %3 = vector.load %arg2[%c0, %c0_1] : memref<16x128xf32, #tpu.memory_space<vmem>>, vector<16x128xf32>
    %c0_2 = arith.constant 0 : index
    %c0_3 = arith.constant 0 : index
    %4 = vector.load %arg3[%c0_2, %c0_3] : memref<16x128xf32, #tpu.memory_space<vmem>>, vector<16x128xf32>
    %5 = arith.subf %3, %4 : vector<16x128xf32>
    %6 = arith.mulf %5, %5 : vector<16x128xf32>
    %c0_4 = arith.constant 0 : index
    %c0_5 = arith.constant 0 : index
    %7 = vector.load %arg4[%c0_4, %c0_5] : memref<8x128xf32, #tpu.memory_space<vmem>>, vector<8x128xf32>
    %8 = vector.shape_cast %6 : vector<16x128xf32> to vector<2x8x128xf32>
    %cst = arith.constant dense<0.000000e+00> : vector<8x128xf32>
    %9 = vector.multi_reduction <add>, %8, %cst [0] : vector<2x8x128xf32> to vector<8x128xf32>
    %10 = arith.addf %7, %9 : vector<8x128xf32>
    %c0_6 = arith.constant 0 : index
    %c0_7 = arith.constant 0 : index
    %11 = vector.load %arg4[%c0_6, %c0_7] : memref<8x128xf32, #tpu.memory_space<vmem>>, vector<8x128xf32>
    tpu.vector_store %arg4[%c0_6, %c0_7], %10 {strides = array<i32>} : memref<8x128xf32, #tpu.memory_space<vmem>>, vector<8x128xf32>,
    return
  }
  func.func @transform_0(%arg0: i32, %arg1: i32) -> (i32, i32) {
    %c1_i32 = arith.constant 1 : i32
    %0 = arith.muli %arg0, %c1_i32 : i32
    %1 = arith.addi %0, %arg1 : i32
    %c0_i32 = arith.constant 0 : i32
    %c0_i32_0 = arith.constant 0 : i32
    return %1, %c0_i32 : i32, i32
  }
  func.func @transform_1(%arg0: i32, %arg1: i32) -> (i32, i32) {
    %c1_i32 = arith.constant 1 : i32
    %0 = arith.muli %arg0, %c1_i32 : i32
    %1 = arith.addi %0, %arg1 : i32
    %c0_i32 = arith.constant 0 : i32
    %c0_i32_0 = arith.constant 0 : i32
    return %1, %c0_i32 : i32, i32
  }
  func.func @transform_2(%arg0: i32, %arg1: i32) -> (i32, i32) {
    %c0_i32 = arith.constant 0 : i32
    %c0_i32_0 = arith.constant 0 : i32
    return %arg0, %c0_i32 : i32, i32
  }
}

</mosaic_0001>

<llo_original>
// kernel: tpu_custom_call.1
$region0: #{tpu_custom_call.1}
  #allocation0 [shape = 'u32[]', space=smem, size = 0x4, offset = 0x4, fixed_abs, tag = 'smem constant byte address 0x4 - core index']
  #allocation1 [shape = 'u32[144,128]{1,0:T(1,128)}', space=vmem, size = 0x12000, scoped, tag = 'internal scratch']
  %s0 = inlined_call_operand.hbm [shape: f32[16,128], index: 0, kind: input, shape index: {}]
  %s1 = inlined_call_operand.hbm [shape: f32[16,128], index: 1, kind: input, shape index: {}]
  %s2 = inlined_call_operand.hbm [shape: f32[8,128], index: 2, kind: output, shape index: {}]
  %s3 = sld [smem:[#allocation0]]
  $region30: #{tpu_custom_call.1} parent=0
    _
  %s5 = ssub.s32 1, %s3
  %s6 = scalar_select 0, %s5, %s3
  $region1: #{tpu_custom_call.1} parent=0
    #allocation2 [shape = 'u8[8192]{0}', space=vmem, size = 0x2000, scoped, tag = 'input window, operand 0, single buffered']
    #allocation3 [shape = 's32[1]{0}', space=sflag, size = 0x4, scoped, tag = 'scoped memory for tpu_custom_call.1']
    #allocation4 [shape = 's32[1]{0}', space=sflag, size = 0x4, scoped, tag = 'scoped memory for tpu_custom_call.1']
    #allocation5 [shape = 'u8[8192]{0}', space=vmem, size = 0x2000, scoped, tag = 'input window, operand 1, single buffered']
    #allocation6 [shape = 's32[1]{0}', space=sflag, size = 0x4, scoped, tag = 'scoped memory for tpu_custom_call.1']
    #allocation7 [shape = 'u8[4096]{0}', space=vmem, size = 0x1000, scoped, tag = 'output window, operand 0, single buffered']
    %7 = vsyncpa [#allocation3], 0
    %8 = vsyncpa [#allocation6], 0
    %9 = vsyncpa [#allocation4], 0
    // Predicated region
    $region2: #{tpu_custom_call.1} parent=1 // pred_check
      _
    $region3: #{tpu_custom_call.1} parent=1 // pred_check_branch
      %11 = sbr.rel (0) target = $region5
    $region4: #{tpu_custom_call.1} parent=1 // pred_region
      %s12 = sadd.s32 0, 0
      %s13 = smul.u32 2, %s12
      %s15 = ssub.s32 256, 256
      %16 = vsyncadd [#allocation3], %s15
      %s17 = smul.addr %s13, 128
      %s18 = scalar_lea.hbm %s0, %s17
      %s19 = sshll.u32 [#allocation2], 4
      %s20 = int_to_ptr.vmem [resolvable:$true] %s19
      %25 = dma.hbm_to_vmem [thread:$0]  %s18, 256, %s20, [#allocation3], 128, 128, 8
    $region5: #{tpu_custom_call.1} parent=1 // pred_fallthru
      _
    // Predicated region
    $region6: #{tpu_custom_call.1} parent=1 // pred_check
      _
    $region7: #{tpu_custom_call.1} parent=1 // pred_check_branch
      %27 = sbr.rel (0) target = $region9
    $region8: #{tpu_custom_call.1} parent=1 // pred_region
      %s28 = sadd.s32 0, 0
      %s29 = smul.u32 2, %s28
      %s31 = ssub.s32 256, 256
      %32 = vsyncadd [#allocation6], %s31
      %s33 = smul.addr %s29, 128
      %s34 = scalar_lea.hbm %s1, %s33
      %s35 = sshll.u32 [#allocation5], 4
      %s36 = int_to_ptr.vmem [resolvable:$true] %s35
      %41 = dma.hbm_to_vmem [thread:$0]  %s34, 256, %s36, [#allocation6], 128, 128, 8
    $region9: #{tpu_custom_call.1} parent=1 // pred_fallthru
      _
    // Predicated region
    $region10: #{tpu_custom_call.1} parent=1 // pred_check
      _
    $region11: #{tpu_custom_call.1} parent=1 // pred_check_branch
      %43 = sbr.rel (0) target = $region13
    $region12: #{tpu_custom_call.1} parent=1 // pred_region
      %44 = dma.done [#allocation3], 256
    $region13: #{tpu_custom_call.1} parent=1 // pred_fallthru
      _
    // Predicated region
    $region14: #{tpu_custom_call.1} parent=1 // pred_check
      _
    $region15: #{tpu_custom_call.1} parent=1 // pred_check_branch
      %46 = sbr.rel (0) target = $region17
    $region16: #{tpu_custom_call.1} parent=1 // pred_region
      %47 = dma.done [#allocation6], 256
    $region17: #{tpu_custom_call.1} parent=1 // pred_fallthru
      _
    %s48 = sadd.s32 0, 0
    %s49 = smul.u32 2, %s48
    %s50 = sadd.s32 0, 0
    %s51 = smul.u32 2, %s50
    %p52 = scmp.eq.s32.totalorder 0, 0
    // Predicated region
    $region18: #{tpu_custom_call.1} parent=1 // pred_check
      %p53 = pneg %p52
    $region19: #{tpu_custom_call.1} parent=1 // pred_check_branch
      %55 = sbr.rel (%p53) target = $region21
    $region20: #{tpu_custom_call.1} parent=1 // pred_region
      %56 = vst [vmem:[#allocation7] sm:$0xff] 0.0
    $region21: #{tpu_custom_call.1} parent=1 // pred_fallthru
      _
    %v57 = vld [vmem:[#allocation2] sm:$0xff]
    %v58 = vld [vmem:[#allocation2 + $0x8] sm:$0xff]
    %v59 = vld [vmem:[#allocation5] sm:$0xff]
    %v60 = vld [vmem:[#allocation5 + $0x8] sm:$0xff]
    %v61 = vsub.f32 %v57, %v59
    %v62 = vsub.f32 %v58, %v60
    %v63 = vmul.f32 %v61, %v61
    %v64 = vmul.f32 %v62, %v62
    %v65 = vld [vmem:[#allocation7] sm:$0xff]
    %v66 = vadd.f32 %v63, %v64
    %v67 = vadd.f32 %v65, %v66
    %68 = vst [vmem:[#allocation7] sm:$0xff] %v67
    // Predicated region
    $region22: #{tpu_custom_call.1} parent=1 // pred_check
      _
    $region23: #{tpu_custom_call.1} parent=1 // pred_check_branch
      %70 = sbr.rel (0) target = $region25
    $region24: #{tpu_custom_call.1} parent=1 // pred_region
      %s72 = ssub.s32 128, 128
      %73 = vsyncadd [#allocation4], %s72
      %s75 = sshll.u32 [#allocation7], 4
      %s76 = int_to_ptr.vmem [resolvable:$true] %s75
      %78 = dma.vmem_to_hbm [thread:$0]  %s76, 128, %s2, [#allocation4]
    $region25: #{tpu_custom_call.1} parent=1 // pred_fallthru
      _
    // Predicated region
    $region26: #{tpu_custom_call.1} parent=1 // pred_check
      _
    $region27: #{tpu_custom_call.1} parent=1 // pred_check_branch
      %80 = sbr.rel (0) target = $region29
    $region28: #{tpu_custom_call.1} parent=1 // pred_region
      %81 = dma.done [#allocation4], 128
    $region29: #{tpu_custom_call.1} parent=1 // pred_fallthru
      _
    %82 = vsyncpa [#allocation3], 1
    %83 = vsyncpa [#allocation6], 1
    %84 = vsyncpa [#allocation4], 1

</llo_original>
